<compile_context>
chip_gen: v7x
topology: tpu7x:2x2x1
jax: 0.10.0
libtpu: 0.0.40
codegen_flags: <defaults>
</compile_context>

<pallas_src>
import math
from dataclasses import dataclass

import jax
import jax.numpy as jnp
from jax.experimental import pallas as pl
from jax.experimental.pallas import tpu as pltpu


@dataclass
class Config:
    n_embd: int = 32


def _round_up(x, m):
    return ((x + m - 1) // m) * m


def _cdiv(a, b):
    return (a + b - 1) // b


def _vmem_budget_bytes():
    """~75% of this generation's physical VMEM (96 MiB v5e/v6e, 48 MiB v7x)."""
    try:
        cap = int(pltpu.get_tpu_info().vmem_capacity_bytes)
    except Exception:
        cap = 64 * 1024 * 1024  # conservative default (v7x-sized)
    return max(16 * 1024 * 1024, (cap * 3) // 4)


_GELU_C = math.sqrt(2.0 / math.pi)


def _mlp_tile(x_ref, wfc_ref, bfc_ref, wproj_ref):
    """(tm,Cp)@(Cp,th) -> +b_fc -> tanh-GELU -> (tm,th)@(th,Cp); f32 partial."""
    h = jnp.dot(x_ref[...], wfc_ref[...], preferred_element_type=jnp.float32)
    h = h + bfc_ref[...].astype(jnp.float32)
    # nn.GELU(approximate='tanh'); tanh lowers to the EUP slot (free next to MXU).
    g = 0.5 * h * (1.0 + jnp.tanh(jnp.float32(_GELU_C)
                                  * (h + jnp.float32(0.044715) * (h * h * h))))
    # TODO(synk): for bf16 activations with small Cp on v6e/v7x, computing the
    # GELU polynomial in bf16 would halve VALU/EUP traffic (not valid on v5e).
    return jnp.dot(g.astype(wproj_ref.dtype), wproj_ref[...],
                   preferred_element_type=jnp.float32)


def _mlp_kernel_resident(x_ref, wfc_ref, bfc_ref, wproj_ref, bproj_ref, o_ref):
    """Whole hidden dim per step; weights VMEM-resident (constant index_map)."""
    part = _mlp_tile(x_ref, wfc_ref, bfc_ref, wproj_ref)
    o_ref[...] = (part + bproj_ref[...].astype(jnp.float32)).astype(o_ref.dtype)


def _mlp_kernel_htiled_scratch(x_ref, wfc_ref, bfc_ref, wproj_ref, bproj_ref,
                               o_ref, acc_ref):
    """H-tiled reduction with an f32 VMEM accumulator (non-f32 outputs)."""
    j = pl.program_id(1)

    @pl.when(j == 0)
    def _():
        acc_ref[...] = jnp.zeros_like(acc_ref)

    acc_ref[...] += _mlp_tile(x_ref, wfc_ref, bfc_ref, wproj_ref)

    @pl.when(j == pl.num_programs(1) - 1)
    def _():
        o_ref[...] = (acc_ref[...]
                      + bproj_ref[...].astype(jnp.float32)).astype(o_ref.dtype)


def _mlp_kernel_htiled_f32out(x_ref, wfc_ref, bfc_ref, wproj_ref, bproj_ref,
                              o_ref):
    """H-tiled reduction accumulating directly into the resident f32 output."""
    j = pl.program_id(1)

    @pl.when(j == 0)
    def _():
        o_ref[...] = pl.broadcast_to(bproj_ref[...].astype(jnp.float32),
                                     o_ref.shape)

    o_ref[...] += _mlp_tile(x_ref, wfc_ref, bfc_ref, wproj_ref)


def _block_vmem_bytes(tm, th, Cp, itemsize, with_scratch):
    """Conservative per-step VMEM estimate (double-buffered inputs/outputs)."""
    b = 2 * tm * Cp * itemsize                 # x (double-buffered)
    b += 2 * tm * Cp * itemsize                # out
    b += 2 * Cp * th * itemsize                # w_fc
    b += 2 * th * Cp * itemsize                # w_proj
    b += 2 * 8 * (th + Cp) * itemsize          # biases (8-sublane padded)
    b += 3 * tm * th * 4                       # h / gelu / cast intermediates
    if with_scratch:
        b += tm * Cp * 4                       # f32 accumulator
    return b


def _select_tiling(M, C, H, itemsize, tm_target=512):
    budget = _vmem_budget_bytes()
    Cp = _round_up(C, 128)

    # Smaller default row tile on small-VMEM chips (v7x) with large channels.
    if budget < 80 * 1024 * 1024 and Cp >= 2048:
        tm_target = min(tm_target, 256)

    # Balanced row tiles (caps zero-row padding waste at <8 rows/tile); keep
    # >=2 tiles for large M so "parallel" shards across both v7x TensorCores.
    n_m = max(1, _cdiv(M, tm_target))
    if n_m == 1 and M >= 256:
        n_m = 2
    tm = min(_round_up(_cdiv(M, n_m), 8), _round_up(M, 8))

    while True:
        # 1) Full weight residency: th == Hp, weights DMA'd once, no scratch.
        Hp_full = _round_up(H, 128)
        if _block_vmem_bytes(tm, Hp_full, Cp, itemsize, False) <= budget:
            return dict(tm=tm, Cp=Cp, th=Hp_full, Hp=Hp_full, resident=True,
                        vmem_limit=budget)
        # 2) Tile the hidden dim; prefer th >= 256 (256-wide MXU on v6e/v7x).
        for th in (512, 256, 128):
            if _block_vmem_bytes(tm, th, Cp, itemsize, True) <= budget:
                return dict(tm=tm, Cp=Cp, th=th, Hp=_round_up(H, th),
                            resident=False, vmem_limit=budget)
        if tm <= 8:
            return dict(tm=8, Cp=Cp, th=128, Hp=_round_up(H, 128),
                        resident=False, vmem_limit=budget)
        tm = max(8, _round_up(tm // 2, 8))


def make_mlp(w_fc, b_fc, w_proj, b_proj, *, max_rows, tm_target=512):
    """Pad/layout weights once; return x -> MLP(x) built on the Pallas kernel.

    Weights are pre-transposed relative to torch's (out, in) convention:
      w_fc: (C, 4C), b_fc: (4C,), w_proj: (4C, C), b_proj: (C,)
    so the kernel does plain row-major matmuls (y = x @ W + b == x @ W_t.T + b).
    """
    C, H = w_fc.shape
    w_dtype = w_fc.dtype
    itemsize = jnp.dtype(w_dtype).itemsize
    t = _select_tiling(max_rows, C, H, itemsize, tm_target)
    Cp, Hp, th, tm_max, resident = t["Cp"], t["Hp"], t["th"], t["tm"], t["resident"]

    # Weight padding hoisted out of the per-call path (exact: padded rows/cols
    # are zero; GELU(0) rows multiply zero w_proj rows).
    wfc_p = jnp.pad(w_fc, ((0, Cp - C), (0, Hp - H)))
    bfc_p = jnp.pad(b_fc, (0, Hp - H)).reshape(1, Hp)
    wproj_p = jnp.pad(w_proj, ((0, Hp - H), (0, Cp - C)))
    bproj_p = jnp.pad(b_proj, (0, Cp - C)).reshape(1, Cp)

    def apply(x):
        B, T, Cx = x.shape
        assert Cx == C, "channel mismatch"
        M = B * T
        x2 = x.reshape(M, C)

        # Per-call balanced row tile, never larger than the fitted one.
        n_m = max(1, _cdiv(M, tm_max))
        tm = min(tm_max, _round_up(_cdiv(M, n_m), 8))
        Mp = _cdiv(M, tm) * tm
        grid_m = Mp // tm
        if Cp != C or Mp != M:
            x2 = jnp.pad(x2, ((0, Mp - M), (0, Cp - C)))

        if resident:
            kernel = _mlp_kernel_resident
            grid = (grid_m,)
            in_specs = [
                pl.BlockSpec((tm, Cp), lambda i: (i, 0)),   # x row tile
                pl.BlockSpec((Cp, Hp), lambda i: (0, 0)),   # w_fc (resident)
                pl.BlockSpec((1, Hp), lambda i: (0, 0)),    # b_fc (resident)
                pl.BlockSpec((Hp, Cp), lambda i: (0, 0)),   # w_proj (resident)
                pl.BlockSpec((1, Cp), lambda i: (0, 0)),    # b_proj (resident)
            ]
            out_specs = pl.BlockSpec((tm, Cp), lambda i: (i, 0))
            scratch = []
            dims = ("parallel",)
        else:
            grid = (grid_m, Hp // th)
            in_specs = [
                pl.BlockSpec((tm, Cp), lambda i, j: (i, 0)),   # x row tile
                pl.BlockSpec((Cp, th), lambda i, j: (0, j)),   # w_fc H-tile
                pl.BlockSpec((1, th), lambda i, j: (0, j)),    # b_fc H-tile
                pl.BlockSpec((th, Cp), lambda i, j: (j, 0)),   # w_proj H-tile
                pl.BlockSpec((1, Cp), lambda i, j: (0, 0)),    # b_proj resident
            ]
            out_specs = pl.BlockSpec((tm, Cp), lambda i, j: (i, 0))
            dims = ("parallel", "arbitrary")
            if x.dtype == jnp.float32:
                kernel = _mlp_kernel_htiled_f32out   # accumulate into o_ref
                scratch = []
            else:
                kernel = _mlp_kernel_htiled_scratch
                scratch = [pltpu.VMEM((tm, Cp), jnp.float32)]
            # TODO(synk): for decode-style shapes (tiny tm) sweep
            # pipeline_mode=pl.Buffered(3) on the weight BlockSpecs.

        weight_passes = 1 if resident else grid_m
        cost = pl.CostEstimate(
            flops=4 * Mp * Cp * Hp,                      # two matmuls
            transcendentals=Mp * Hp,                     # tanh
            bytes_accessed=int(2 * Mp * Cp * itemsize
                               + weight_passes * 2 * Cp * Hp * itemsize
                               + (Hp + Cp) * itemsize),
        )

        out = pl.pallas_call(
            kernel,
            out_shape=jax.ShapeDtypeStruct((Mp, Cp), x.dtype),
            grid_spec=pltpu.PrefetchScalarGridSpec(
                num_scalar_prefetch=0,
                grid=grid,
                in_specs=in_specs,
                out_specs=out_specs,
                scratch_shapes=scratch,
            ),
            compiler_params=pltpu.CompilerParams(
                dimension_semantics=dims,
                vmem_limit_bytes=int(t["vmem_limit"]),
            ),
            cost_estimate=cost,
        )(x2, wfc_p, bfc_p, wproj_p, bproj_p)

        return out[:M, :C].reshape(B, T, C)

    return apply


def mlp_pallas(x, w_fc, b_fc, w_proj, b_proj):
    """One-off convenience wrapper (prefer make_mlp to pad weights once)."""
    B, T, _ = x.shape
    return make_mlp(w_fc, b_fc, w_proj, b_proj, max_rows=B * T)(x)


def gelu_tanh_ref(x):
    c = math.sqrt(2.0 / math.pi)
    return 0.5 * x * (1.0 + jnp.tanh(c * (x + 0.044715 * x ** 3)))


if __name__ == "__main__":
    cfg = Config(n_embd=32)
    B, T, C = 2, 8, cfg.n_embd
    H = 4 * C

    key = jax.random.PRNGKey(0)
    kx, k1, k2, k3, k4 = jax.random.split(key, 5)

    x = jax.random.normal(kx, (B, T, C), dtype=jnp.float32)

    # Deterministic params (nn.Linear shapes), stored pre-transposed (in, out).
    w_fc = jax.random.normal(k1, (C, H), dtype=jnp.float32) * (1.0 / math.sqrt(C))
    b_fc = jax.random.normal(k2, (H,), dtype=jnp.float32) * 0.02
    w_proj = jax.random.normal(k3, (H, C), dtype=jnp.float32) * (1.0 / math.sqrt(H))
    b_proj = jax.random.normal(k4, (C,), dtype=jnp.float32) * 0.02

    mlp = make_mlp(w_fc, b_fc, w_proj, b_proj, max_rows=B * T)
    y = jax.block_until_ready(mlp(x))

    # Pure-JAX reference check (tanh-approx GELU, matching nn.GELU('tanh')).
    x2 = x.reshape(B * T, C)
    ref = (gelu_tanh_ref(x2 @ w_fc + b_fc) @ w_proj + b_proj).reshape(B, T, C)
    assert jnp.allclose(y, ref, atol=1e-4, rtol=1e-4), "mismatch vs reference"

    print("KERNEL_OK")
</pallas_src>

<mosaic_0001>
module attributes {stable_mosaic.version = 11 : i64} {
  func.func @_mlp_kernel_resident(%arg0: i32, %arg1: memref<16x128xf32, #tpu.memory_space<vmem>>, %arg2: memref<128x128xf32, #tpu.memory_space<vmem>>, %arg3: memref<1x128xf32, #tpu.memory_space<vmem>>, %arg4: memref<128x128xf32, #tpu.memory_space<vmem>>, %arg5: memref<1x128xf32, #tpu.memory_space<vmem>>, %arg6: memref<16x128xf32, #tpu.memory_space<vmem>>) attributes {dimension_semantics = [#tpu.dimension_semantics<parallel>], iteration_bounds = array<i64: 1>, scalar_prefetch = 0 : i64, scratch_operands = 0 : i64, tpu.core_type = #tpu.core_type<tc>, window_params = [{transform_indices = @transform_0, window_bounds = array<i64: 16, 128>}, {pipeline_mode = #tpu.pipeline_mode<synchronous>, transform_indices = @transform_1, window_bounds = array<i64: 128, 128>}, {pipeline_mode = #tpu.pipeline_mode<synchronous>, transform_indices = @transform_2, window_bounds = array<i64: 1, 128>}, {pipeline_mode = #tpu.pipeline_mode<synchronous>, transform_indices = @transform_3, window_bounds = array<i64: 128, 128>}, {pipeline_mode = #tpu.pipeline_mode<synchronous>, transform_indices = @transform_4, window_bounds = array<i64: 1, 128>}, {transform_indices = @transform_5, window_bounds = array<i64: 16, 128>}]} {
    %c0 = arith.constant 0 : index
    %c0_0 = arith.constant 0 : index
    %0 = vector.load %arg1[%c0, %c0_0] : memref<16x128xf32, #tpu.memory_space<vmem>>, vector<16x128xf32>
    %c0_1 = arith.constant 0 : index
    %c0_2 = arith.constant 0 : index
    %1 = vector.load %arg2[%c0_1, %c0_2] : memref<128x128xf32, #tpu.memory_space<vmem>>, vector<128x128xf32>
    %cst = arith.constant dense<0.000000e+00> : vector<16x128xf32>
    %2 = tpu.matmul %0, %1, %cst {dimension_numbers = #tpu.dot_dimension_numbers<[1], [0], [0], [1], [0, 0, 1, 1], [], []>} : vector<16x128xf32>, vector<128x128xf32>, vector<16x128xf32> -> vector<16x128xf32>
    %c0_3 = arith.constant 0 : index
    %c0_4 = arith.constant 0 : index
    %3 = vector.load %arg3[%c0_3, %c0_4] : memref<1x128xf32, #tpu.memory_space<vmem>>, vector<1x128xf32>
    %4 = vector.broadcast %3 : vector<1x128xf32> to vector<16x128xf32>
    %5 = arith.addf %2, %4 : vector<16x128xf32>
    %cst_5 = arith.constant 5.000000e-01 : f32
    %6 = vector.broadcast %cst_5 : f32 to vector<16x128xf32>
    %7 = arith.mulf %6, %5 : vector<16x128xf32>
    %8 = arith.mulf %5, %5 : vector<16x128xf32>
    %9 = arith.mulf %8, %5 : vector<16x128xf32>
    %cst_6 = arith.constant 4.471500e-02 : f32
    %10 = vector.broadcast %cst_6 : f32 to vector<16x128xf32>
    %11 = arith.mulf %10, %9 : vector<16x128xf32>
    %12 = arith.addf %5, %11 : vector<16x128xf32>
    %cst_7 = arith.constant 0.797884583 : f32
    %13 = vector.broadcast %cst_7 : f32 to vector<16x128xf32>
    %14 = arith.mulf %13, %12 : vector<16x128xf32>
    %15 = math.tanh %14 : vector<16x128xf32>
    %cst_8 = arith.constant 1.000000e+00 : f32
    %16 = vector.broadcast %cst_8 : f32 to vector<16x128xf32>
    %17 = arith.addf %16, %15 : vector<16x128xf32>
    %18 = arith.mulf %7, %17 : vector<16x128xf32>
    %c0_9 = arith.constant 0 : index
    %c0_10 = arith.constant 0 : index
    %19 = vector.load %arg4[%c0_9, %c0_10] : memref<128x128xf32, #tpu.memory_space<vmem>>, vector<128x128xf32>
    %cst_11 = arith.constant dense<0.000000e+00> : vector<16x128xf32>
    %20 = tpu.matmul %18, %19, %cst_11 {dimension_numbers = #tpu.dot_dimension_numbers<[1], [0], [0], [1], [0, 0, 1, 1], [], []>} : vector<16x128xf32>, vector<128x128xf32>, vector<16x128xf32> -> vector<16x128xf32>
    %c0_12 = arith.constant 0 : index
    %c0_13 = arith.constant 0 : index
    %21 = vector.load %arg5[%c0_12, %c0_13] : memref<1x128xf32, #tpu.memory_space<vmem>>, vector<1x128xf32>
    %22 = vector.broadcast %21 : vector<1x128xf32> to vector<16x128xf32>
    %23 = arith.addf %20, %22 : vector<16x128xf32>
    %c0_14 = arith.constant 0 : index
    %c0_15 = arith.constant 0 : index
    %24 = vector.load %arg6[%c0_14, %c0_15] : memref<16x128xf32, #tpu.memory_space<vmem>>, vector<16x128xf32>
    tpu.vector_store %arg6[%c0_14, %c0_15], %23 {strides = array<i32>} : memref<16x128xf32, #tpu.memory_space<vmem>>, vector<16x128xf32>,
    return
  }
  func.func @transform_0(%arg0: i32) -> (i32, i32) {
    %c0_i32 = arith.constant 0 : i32
    %c0_i32_0 = arith.constant 0 : i32
    return %arg0, %c0_i32 : i32, i32
  }
  func.func @transform_1(%arg0: i32) -> (i32, i32) {
    %c0_i32 = arith.constant 0 : i32
    %c0_i32_0 = arith.constant 0 : i32
    %c0_i32_1 = arith.constant 0 : i32
    return %c0_i32, %c0_i32_0 : i32, i32
  }
  func.func @transform_2(%arg0: i32) -> (i32, i32) {
    %c0_i32 = arith.constant 0 : i32
    %c0_i32_0 = arith.constant 0 : i32
    %c0_i32_1 = arith.constant 0 : i32
    return %c0_i32, %c0_i32_0 : i32, i32
  }
  func.func @transform_3(%arg0: i32) -> (i32, i32) {
    %c0_i32 = arith.constant 0 : i32
    %c0_i32_0 = arith.constant 0 : i32
    %c0_i32_1 = arith.constant 0 : i32
    return %c0_i32, %c0_i32_0 : i32, i32
  }
  func.func @transform_4(%arg0: i32) -> (i32, i32) {
    %c0_i32 = arith.constant 0 : i32
    %c0_i32_0 = arith.constant 0 : i32
    %c0_i32_1 = arith.constant 0 : i32
    return %c0_i32, %c0_i32_0 : i32, i32
  }
  func.func @transform_5(%arg0: i32) -> (i32, i32) {
    %c0_i32 = arith.constant 0 : i32
    %c0_i32_0 = arith.constant 0 : i32
    return %arg0, %c0_i32 : i32, i32
  }
}

</mosaic_0001>

<llo_original>
// kernel: tpu_custom_call.1
$region0: #{tpu_custom_call.1}
  #allocation0 [shape = 'u32[]', space=smem, size = 0x4, offset = 0x4, fixed_abs, tag = 'smem constant byte address 0x4 - core index']
  #allocation1 [shape = 'u32[144,128]{1,0:T(1,128)}', space=vmem, size = 0x12000, scoped, tag = 'internal scratch']
  %s0 = inlined_call_operand.hbm [shape: f32[16,128], index: 0, kind: input, shape index: {}]
  %s1 = inlined_call_operand.hbm [shape: f32[128,128], index: 1, kind: input, shape index: {}]
  %s2 = inlined_call_operand.vmem [shape: f32[1,128], index: 2, kind: input, shape index: {}]
  %s3 = inlined_call_operand.hbm [shape: f32[128,128], index: 3, kind: input, shape index: {}]
  %s4 = inlined_call_operand.vmem [shape: f32[1,128], index: 4, kind: input, shape index: {}]
  %s5 = inlined_call_operand.hbm [shape: f32[16,128], index: 5, kind: output, shape index: {}]
  %s6 = sld [smem:[#allocation0]]
  $region42: #{tpu_custom_call.1} parent=0
    _
  %s8 = ssub.s32 1, %s6
  %s9 = scalar_select 0, %s8, %s6
  $region1: #{tpu_custom_call.1} parent=0
    #allocation2 [shape = 'u8[8192]{0}', space=vmem, size = 0x2000, scoped, tag = 'input window, operand 0, single buffered']
    #allocation3 [shape = 's32[1]{0}', space=sflag, size = 0x4, scoped, tag = 'scoped memory for tpu_custom_call.1']
    #allocation4 [shape = 's32[1]{0}', space=sflag, size = 0x4, scoped, tag = 'scoped memory for tpu_custom_call.1']
    #allocation5 [shape = 'u8[65536]{0}', space=vmem, size = 0x10000, scoped, tag = 'input window, operand 1, single buffered']
    #allocation6 [shape = 's32[1]{0}', space=sflag, size = 0x4, scoped, tag = 'scoped memory for tpu_custom_call.1']
    #allocation7 [shape = 'u8[65536]{0}', space=vmem, size = 0x10000, scoped, tag = 'input window, operand 3, single buffered']
    #allocation8 [shape = 'u8[8192]{0}', space=vmem, size = 0x2000, scoped, tag = 'output window, operand 0, single buffered']
    %10 = vsyncpa [#allocation3], 0
    %11 = vsyncpa [#allocation6], 0
    %12 = vsyncpa [#allocation4], 0
    // Predicated region
    $region2: #{tpu_custom_call.1} parent=1 // pred_check
      _
    $region3: #{tpu_custom_call.1} parent=1 // pred_check_branch
      %14 = sbr.rel (0) target = $region5
    $region4: #{tpu_custom_call.1} parent=1 // pred_region
      %s16 = ssub.s32 256, 256
      %17 = vsyncadd [#allocation3], %s16
      %s18 = sshll.u32 [#allocation2], 4
      %s19 = int_to_ptr.vmem [resolvable:$true] %s18
      %24 = dma.hbm_to_vmem [thread:$0]  %s0, 256, %s19, [#allocation3], 128, 128, 8
    $region5: #{tpu_custom_call.1} parent=1 // pred_fallthru
      _
    // Predicated region
    $region6: #{tpu_custom_call.1} parent=1 // pred_check
      _
    $region7: #{tpu_custom_call.1} parent=1 // pred_check_branch
      %26 = sbr.rel (0) target = $region9
    $region8: #{tpu_custom_call.1} parent=1 // pred_region
      %s28 = ssub.s32 2048, 2048
      %29 = vsyncadd [#allocation6], %s28
      %s30 = sshll.u32 [#allocation5], 4
      %s31 = int_to_ptr.vmem [resolvable:$true] %s30
      %36 = dma.hbm_to_vmem [thread:$0]  %s1, 2048, %s31, [#allocation6], 128, 128, 8
    $region9: #{tpu_custom_call.1} parent=1 // pred_fallthru
      _
    // Predicated region
    $region10: #{tpu_custom_call.1} parent=1 // pred_check
      _
    $region11: #{tpu_custom_call.1} parent=1 // pred_check_branch
      %38 = sbr.rel (0) target = $region13
    $region12: #{tpu_custom_call.1} parent=1 // pred_region
      _
    $region13: #{tpu_custom_call.1} parent=1 // pred_fallthru
      _
    // Predicated region
    $region14: #{tpu_custom_call.1} parent=1 // pred_check
      _
    $region15: #{tpu_custom_call.1} parent=1 // pred_check_branch
      %40 = sbr.rel (0) target = $region17
    $region16: #{tpu_custom_call.1} parent=1 // pred_region
      %s42 = ssub.s32 2048, 2048
      %43 = vsyncadd [#allocation6], %s42
      %s44 = sshll.u32 [#allocation7], 4
      %s45 = int_to_ptr.vmem [resolvable:$true] %s44
      %50 = dma.hbm_to_vmem [thread:$0]  %s3, 2048, %s45, [#allocation6], 128, 128, 8
    $region17: #{tpu_custom_call.1} parent=1 // pred_fallthru
      _
    // Predicated region
    $region18: #{tpu_custom_call.1} parent=1 // pred_check
      _
    $region19: #{tpu_custom_call.1} parent=1 // pred_check_branch
      %52 = sbr.rel (0) target = $region21
    $region20: #{tpu_custom_call.1} parent=1 // pred_region
      _
    $region21: #{tpu_custom_call.1} parent=1 // pred_fallthru
      _
    // Predicated region
    $region22: #{tpu_custom_call.1} parent=1 // pred_check
      _
    $region23: #{tpu_custom_call.1} parent=1 // pred_check_branch
      %54 = sbr.rel (0) target = $region25
    $region24: #{tpu_custom_call.1} parent=1 // pred_region
      %55 = dma.done [#allocation3], 256
    $region25: #{tpu_custom_call.1} parent=1 // pred_fallthru
      _
    // Predicated region
    $region26: #{tpu_custom_call.1} parent=1 // pred_check
      _
    $region27: #{tpu_custom_call.1} parent=1 // pred_check_branch
      %57 = sbr.rel (0) target = $region29
    $region28: #{tpu_custom_call.1} parent=1 // pred_region
      %58 = dma.done [#allocation6], 2048
    $region29: #{tpu_custom_call.1} parent=1 // pred_fallthru
      _
    // Predicated region
    $region30: #{tpu_custom_call.1} parent=1 // pred_check
      _
    $region31: #{tpu_custom_call.1} parent=1 // pred_check_branch
      %60 = sbr.rel (0) target = $region33
    $region32: #{tpu_custom_call.1} parent=1 // pred_region
      %61 = dma.done [#allocation6], 2048
    $region33: #{tpu_custom_call.1} parent=1 // pred_fallthru
      _
    %v62 = vld [vmem:[#allocation2] sm:$0xff]
    %v63 = vld [vmem:[#allocation2 + $0x8] sm:$0xff]
    %v64 = vld [vmem:[#allocation5] sm:$0xff]
    %v65 = vld [vmem:[#allocation5 + $0x8] sm:$0xff]
    %v66 = vld [vmem:[#allocation5 + $0x10] sm:$0xff]
    %v67 = vld [vmem:[#allocation5 + $0x18] sm:$0xff]
    %v68 = vld [vmem:[#allocation5 + $0x20] sm:$0xff]
    %v69 = vld [vmem:[#allocation5 + $0x28] sm:$0xff]
    %v70 = vld [vmem:[#allocation5 + $0x30] sm:$0xff]
    %v71 = vld [vmem:[#allocation5 + $0x38] sm:$0xff]
    %v72 = vld [vmem:[#allocation5 + $0x40] sm:$0xff]
    %v73 = vld [vmem:[#allocation5 + $0x48] sm:$0xff]
    %v74 = vld [vmem:[#allocation5 + $0x50] sm:$0xff]
    %v75 = vld [vmem:[#allocation5 + $0x58] sm:$0xff]
    %v76 = vld [vmem:[#allocation5 + $0x60] sm:$0xff]
    %v77 = vld [vmem:[#allocation5 + $0x68] sm:$0xff]
    %v78 = vld [vmem:[#allocation5 + $0x70] sm:$0xff]
    %v79 = vld [vmem:[#allocation5 + $0x78] sm:$0xff]
    %v80 = vld [vmem:[%s2] sm:$0x1]
    %v82 = vlaneseq
    %v83 = vshrl.u32 %v82, 7
    %v84 = vsub.s32 0, %v83
    %v85 = vrot.slane %v80, %v84
    %87 = vmatprep.subr.mxu0 0.0
    %88 = vmatpush1.msra.mxu0 %v64
    %89 = vmatprep.subr.mxu0 0.0
    %90 = vmatpush1.msra.mxu0 %v65
    %91 = vmatprep.subr.mxu0 0.0
    %92 = vmatpush1.msra.mxu0 %v66
    %93 = vmatprep.subr.mxu0 0.0
    %94 = vmatpush1.msra.mxu0 %v67
    %95 = vmatprep.subr.mxu0 0.0
    %96 = vmatpush1.msra.mxu0 %v68
    %97 = vmatprep.subr.mxu0 0.0
    %98 = vmatpush1.msra.mxu0 %v69
    %99 = vmatprep.subr.mxu0 0.0
    %100 = vmatpush1.msra.mxu0 %v70
    %101 = vmatprep.subr.mxu0 0.0
    %102 = vmatpush1.msra.mxu0 %v71
    %103 = vmatprep.subr.mxu0 0.0
    %104 = vmatpush1.msra.mxu0 %v72
    %105 = vmatprep.subr.mxu0 0.0
    %106 = vmatpush1.msra.mxu0 %v73
    %107 = vmatprep.subr.mxu0 0.0
    %108 = vmatpush1.msra.mxu0 %v74
    %109 = vmatprep.subr.mxu0 0.0
    %110 = vmatpush1.msra.mxu0 %v75
    %111 = vmatprep.subr.mxu0 0.0
    %112 = vmatpush1.msra.mxu0 %v76
    %113 = vmatprep.subr.mxu0 0.0
    %114 = vmatpush1.msra.mxu0 %v77
    %115 = vmatprep.subr.mxu0 0.0
    %116 = vmatpush1.msra.mxu0 %v78
    %117 = vmatprep.subr.mxu0 0.0
    %118 = vmatpush1.msra.mxu0 %v79
    %119 = vmatprep.subr.mxu0 0.0
    %120 = vmatpush1.msra.mxu0 0.0
    %121 = vmatprep.subr.mxu0 0.0
    %122 = vmatpush1.msra.mxu0 0.0
    %123 = vmatprep.subr.mxu0 0.0
    %124 = vmatpush1.msra.mxu0 0.0
    %125 = vmatprep.subr.mxu0 0.0
    %126 = vmatpush1.msra.mxu0 0.0
    %127 = vmatprep.subr.mxu0 0.0
    %128 = vmatpush1.msra.mxu0 0.0
    %129 = vmatprep.subr.mxu0 0.0
    %130 = vmatpush1.msra.mxu0 0.0
    %131 = vmatprep.subr.mxu0 0.0
    %132 = vmatpush1.msra.mxu0 0.0
    %133 = vmatprep.subr.mxu0 0.0
    %134 = vmatpush1.msra.mxu0 0.0
    %135 = vmatprep.subr.mxu0 0.0
    %136 = vmatpush1.msra.mxu0 0.0
    %137 = vmatprep.subr.mxu0 0.0
    %138 = vmatpush1.msra.mxu0 0.0
    %139 = vmatprep.subr.mxu0 0.0
    %140 = vmatpush1.msra.mxu0 0.0
    %141 = vmatprep.subr.mxu0 0.0
    %142 = vmatpush1.msra.mxu0 0.0
    %143 = vmatprep.subr.mxu0 0.0
    %144 = vmatpush1.msra.mxu0 0.0
    %145 = vmatprep.subr.mxu0 0.0
    %146 = vmatpush1.msra.mxu0 0.0
    %147 = vmatprep.subr.mxu0 0.0
    %148 = vmatpush1.msra.mxu0 0.0
    %149 = vmatprep.subr.mxu0 0.0
    %150 = vmatpush1.msra.mxu0 0.0
    %151 = vmatprep.mubr.f32.mxu0 0.0
    %152 = vmatmul.mubr.f32.gmra.mrb[0].mxu0 %v62
    %v153 = vpop.f32.mrb[0].mxu0
    %v154 = vadd.f32 %v85, %v153
    %v155 = vpop.f32.mrb[0].mxu0
    %156 = vmatprep.mubr.f32.mxu0 0.0
    %157 = vmatmul.mubr.f32.gmra.mrb[0].mxu0 %v63
    %v158 = vpop.f32.mrb[0].mxu0
    %v159 = vadd.f32 %v85, %v158
    %v160 = vpop.f32.mrb[0].mxu0
    %161 = vdwg.mxu0
    %v162 = vmul.f32 %v154, 0.5
    %v163 = vmul.f32 %v159, 0.5
    %v164 = vmul.f32 %v154, %v154
    %v165 = vmul.f32 %v159, %v159
    %v166 = vmul.f32 %v164, %v154
    %v167 = vmul.f32 %v165, %v159
    %v168 = vmul.f32 %v166, 0.044715
    %v169 = vmul.f32 %v167, 0.044715
    %v170 = vadd.f32 %v154, %v168
    %v171 = vadd.f32 %v159, %v169
    %v172 = vmul.f32 %v170, 0.7978846
    %v173 = vmul.f32 %v171, 0.7978846
    %v174 = vtanh.pop %v172
    %v175 = vtanh.pop %v173
    %v176 = vadd.f32 %v174, 1.0
    %v177 = vadd.f32 %v175, 1.0
    %v178 = vmul.f32 %v162, %v176
    %v179 = vmul.f32 %v163, %v177
    %v180 = vld [vmem:[#allocation7] sm:$0xff]
    %v181 = vld [vmem:[#allocation7 + $0x8] sm:$0xff]
    %v182 = vld [vmem:[#allocation7 + $0x10] sm:$0xff]
    %v183 = vld [vmem:[#allocation7 + $0x18] sm:$0xff]
    %v184 = vld [vmem:[#allocation7 + $0x20] sm:$0xff]
    %v185 = vld [vmem:[#allocation7 + $0x28] sm:$0xff]
    %v186 = vld [vmem:[#allocation7 + $0x30] sm:$0xff]
    %v187 = vld [vmem:[#allocation7 + $0x38] sm:$0xff]
    %v188 = vld [vmem:[#allocation7 + $0x40] sm:$0xff]
    %v189 = vld [vmem:[#allocation7 + $0x48] sm:$0xff]
    %v190 = vld [vmem:[#allocation7 + $0x50] sm:$0xff]
    %v191 = vld [vmem:[#allocation7 + $0x58] sm:$0xff]
    %v192 = vld [vmem:[#allocation7 + $0x60] sm:$0xff]
    %v193 = vld [vmem:[#allocation7 + $0x68] sm:$0xff]
    %v194 = vld [vmem:[#allocation7 + $0x70] sm:$0xff]
    %v195 = vld [vmem:[#allocation7 + $0x78] sm:$0xff]
    %v196 = vld [vmem:[%s4] sm:$0x1]
    %v198 = vlaneseq
    %v199 = vshrl.u32 %v198, 7
    %v200 = vsub.s32 0, %v199
    %v201 = vrot.slane %v196, %v200
    %203 = vmatprep.subr.mxu0 0.0
    %204 = vmatpush1.msra.mxu0 %v180
    %205 = vmatprep.subr.mxu0 0.0
    %206 = vmatpush1.msra.mxu0 %v181
    %207 = vmatprep.subr.mxu0 0.0
    %208 = vmatpush1.msra.mxu0 %v182
    %209 = vmatprep.subr.mxu0 0.0
    %210 = vmatpush1.msra.mxu0 %v183
    %211 = vmatprep.subr.mxu0 0.0
    %212 = vmatpush1.msra.mxu0 %v184
    %213 = vmatprep.subr.mxu0 0.0
    %214 = vmatpush1.msra.mxu0 %v185
    %215 = vmatprep.subr.mxu0 0.0
    %216 = vmatpush1.msra.mxu0 %v186
    %217 = vmatprep.subr.mxu0 0.0
    %218 = vmatpush1.msra.mxu0 %v187
    %219 = vmatprep.subr.mxu0 0.0
    %220 = vmatpush1.msra.mxu0 %v188
    %221 = vmatprep.subr.mxu0 0.0
    %222 = vmatpush1.msra.mxu0 %v189
    %223 = vmatprep.subr.mxu0 0.0
    %224 = vmatpush1.msra.mxu0 %v190
    %225 = vmatprep.subr.mxu0 0.0
    %226 = vmatpush1.msra.mxu0 %v191
    %227 = vmatprep.subr.mxu0 0.0
    %228 = vmatpush1.msra.mxu0 %v192
    %229 = vmatprep.subr.mxu0 0.0
    %230 = vmatpush1.msra.mxu0 %v193
    %231 = vmatprep.subr.mxu0 0.0
    %232 = vmatpush1.msra.mxu0 %v194
    %233 = vmatprep.subr.mxu0 0.0
    %234 = vmatpush1.msra.mxu0 %v195
    %235 = vmatprep.subr.mxu0 0.0
    %236 = vmatpush1.msra.mxu0 0.0
    %237 = vmatprep.subr.mxu0 0.0
    %238 = vmatpush1.msra.mxu0 0.0
    %239 = vmatprep.subr.mxu0 0.0
    %240 = vmatpush1.msra.mxu0 0.0
    %241 = vmatprep.subr.mxu0 0.0
    %242 = vmatpush1.msra.mxu0 0.0
    %243 = vmatprep.subr.mxu0 0.0
    %244 = vmatpush1.msra.mxu0 0.0
    %245 = vmatprep.subr.mxu0 0.0
    %246 = vmatpush1.msra.mxu0 0.0
    %247 = vmatprep.subr.mxu0 0.0
    %248 = vmatpush1.msra.mxu0 0.0
    %249 = vmatprep.subr.mxu0 0.0
    %250 = vmatpush1.msra.mxu0 0.0
    %251 = vmatprep.subr.mxu0 0.0
    %252 = vmatpush1.msra.mxu0 0.0
    %253 = vmatprep.subr.mxu0 0.0
    %254 = vmatpush1.msra.mxu0 0.0
    %255 = vmatprep.subr.mxu0 0.0
    %256 = vmatpush1.msra.mxu0 0.0
    %257 = vmatprep.subr.mxu0 0.0
    %258 = vmatpush1.msra.mxu0 0.0
    %259 = vmatprep.subr.mxu0 0.0
    %260 = vmatpush1.msra.mxu0 0.0
    %261 = vmatprep.subr.mxu0 0.0
    %262 = vmatpush1.msra.mxu0 0.0
    %263 = vmatprep.subr.mxu0 0.0
    %264 = vmatpush1.msra.mxu0 0.0
    %265 = vmatprep.subr.mxu0 0.0
    %266 = vmatpush1.msra.mxu0 0.0
    %267 = vmatprep.mubr.f32.mxu0 0.0
    %268 = vmatmul.mubr.f32.gmra.mrb[0].mxu0 %v178
    %v269 = vpop.f32.mrb[0].mxu0
    %v270 = vadd.f32 %v201, %v269
    %v271 = vpop.f32.mrb[0].mxu0
    %272 = vmatprep.mubr.f32.mxu0 0.0
    %273 = vmatmul.mubr.f32.gmra.mrb[0].mxu0 %v179
    %v274 = vpop.f32.mrb[0].mxu0
    %v275 = vadd.f32 %v201, %v274
    %v276 = vpop.f32.mrb[0].mxu0
    %277 = vdwg.mxu0
    %278 = vst [vmem:[#allocation8] sm:$0xff] %v270
    %279 = vst [vmem:[#allocation8 + $0x8] sm:$0xff] %v275
    // Predicated region
    $region34: #{tpu_custom_call.1} parent=1 // pred_check
      _
    $region35: #{tpu_custom_call.1} parent=1 // pred_check_branch
      %281 = sbr.rel (0) target = $region37
    $region36: #{tpu_custom_call.1} parent=1 // pred_region
      %s283 = ssub.s32 256, 256
      %284 = vsyncadd [#allocation4], %s283
      %s285 = sshll.u32 [#allocation8], 4
      %s286 = int_to_ptr.vmem [resolvable:$true] %s285
      %291 = dma.vmem_to_hbm [thread:$0]  %s286, 256, %s5, [#allocation4], 128, 128, 8
    $region37: #{tpu_custom_call.1} parent=1 // pred_fallthru
      _
    // Predicated region
    $region38: #{tpu_custom_call.1} parent=1 // pred_check
      _
    $region39: #{tpu_custom_call.1} parent=1 // pred_check_branch
      %293 = sbr.rel (0) target = $region41
    $region40: #{tpu_custom_call.1} parent=1 // pred_region
      %294 = dma.done [#allocation4], 256
    $region41: #{tpu_custom_call.1} parent=1 // pred_fallthru
      _
    %295 = vsyncpa [#allocation3], 1
    %296 = vsyncpa [#allocation6], 1
    %297 = vsyncpa [#allocation4], 1

</llo_original>
